<compile_context>
chip_gen: v6e
topology: v6e:2x2x1
jax: 0.10.0
libtpu: 0.0.40
codegen_flags: <defaults>
</compile_context>

<pallas_src>
import functools
import math

import jax
import jax.numpy as jnp
from jax.experimental import pallas as pl
from jax.experimental.pallas import tpu as pltpu


# ------------------------------ helpers -------------------------------------

def _round_up(x, n):
    return ((x + n - 1) // n) * n


def _gelu_exact(x):
    # nn.GELU() default = exact erf-based GELU (computed in f32).
    return 0.5 * x * (1.0 + jax.lax.erf(x * (1.0 / math.sqrt(2.0))))


# ------------------------------- kernel -------------------------------------

def mlp_kernel(x_ref, w1_ref, b1_ref, w2_ref, b2_ref, out_ref, acc_ref,
               *, compute_dtype):
    """One grid step: (row-tile i, hidden-tile h).

    Computes the partial contribution of hidden tile `h` to the output rows of
    tile `i` and accumulates it in an f32 VMEM scratch.  The output tile is
    written only on the last hidden tile (bias add + cast).
    """
    h_idx = pl.program_id(1)
    n_h = pl.num_programs(1)

    @pl.when(h_idx == 0)
    def _init():
        acc_ref[...] = jnp.zeros_like(acc_ref)

    # --- fc1 (this hidden tile): bf16 MXU operands, f32 accumulation ---------
    x = x_ref[...].astype(compute_dtype)                        # (tm, Din)
    w1 = w1_ref[...].astype(compute_dtype)                      # (Din, th)
    hid = jnp.dot(x, w1, preferred_element_type=jnp.float32)    # (tm, th) f32
    hid = hid + b1_ref[...].astype(jnp.float32)                 # (1, th) broadcasts
    hid = _gelu_exact(hid)                                      # exact GELU, f32
    # dropout(p=0.0) is the identity.
    # TODO(synk): stochastic dropout for p > 0 via pltpu.prng_seed / prng_random_bits.

    # --- fc2 partial: accumulate this hidden tile's contribution -------------
    acc_ref[...] += jnp.dot(hid.astype(compute_dtype),
                            w2_ref[...].astype(compute_dtype),
                            preferred_element_type=jnp.float32)

    @pl.when(h_idx == n_h - 1)
    def _finalize():
        out_ref[...] = (acc_ref[...] + b2_ref[...].astype(jnp.float32)
                        ).astype(out_ref.dtype)


# ------------------------------- wrapper ------------------------------------

def mlp_forward(x, w1, b1, w2, b2, *,
                block_rows=128, block_hidden=512,
                compute_dtype=jnp.bfloat16):
    """Pallas MLP forward.  x: (..., D_in) -> (..., D_out)."""
    d_in = x.shape[-1]
    d_hidden = w1.shape[1]
    d_out = w2.shape[1]
    assert w1.shape == (d_in, d_hidden)
    assert b1.shape == (d_hidden,)
    assert w2.shape == (d_hidden, d_out)
    assert b2.shape == (d_out,)

    lead_shape = x.shape[:-1]
    xm = x.reshape(-1, d_in)                     # (M, D_in): lane-dense rows
    m = xm.shape[0]

    # ---- row tiling: multiple of 8 sublanes; pad M so the grid divides ------
    tm = min(block_rows, _round_up(m, 8))
    m_pad = _round_up(m, tm)
    if m_pad != m:
        xm = jnp.pad(xm, ((0, m_pad - m), (0, 0)))

    # ---- hidden tiling: multiple of 128 lanes; pad H if needed --------------
    th = min(block_hidden, _round_up(d_hidden, 128))
    h_pad = _round_up(d_hidden, th)
    if h_pad != d_hidden:
        # GELU(0 + 0) = 0 and the padded W2 rows are zero -> zero contribution.
        w1 = jnp.pad(w1, ((0, 0), (0, h_pad - d_hidden)))
        b1 = jnp.pad(b1, ((0, h_pad - d_hidden),))
        w2 = jnp.pad(w2, ((0, h_pad - d_hidden), (0, 0)))
    n_h = h_pad // th

    # ---- output columns padded to 128 lanes: unmasked, lane-dense stores ----
    d_out_pad = _round_up(d_out, 128)
    if d_out_pad != d_out:
        w2 = jnp.pad(w2, ((0, 0), (0, d_out_pad - d_out)))
        b2 = jnp.pad(b2, ((0, d_out_pad - d_out),))

    b1_2d = b1.reshape(1, h_pad)
    b2_2d = b2.reshape(1, d_out_pad)

    grid = (m_pad // tm, n_h)          # rows parallel, hidden reduction last
    kernel = functools.partial(mlp_kernel, compute_dtype=compute_dtype)

    out = pl.pallas_call(
        kernel,
        out_shape=jax.ShapeDtypeStruct((m_pad, d_out_pad), x.dtype),
        grid_spec=pltpu.PrefetchScalarGridSpec(
            num_scalar_prefetch=0,
            grid=grid,
            in_specs=[
                pl.BlockSpec((tm, d_in),        lambda i, h: (i, 0)),  # x rows
                pl.BlockSpec((d_in, th),        lambda i, h: (0, h)),  # W1 col tile
                pl.BlockSpec((1, th),           lambda i, h: (0, h)),  # b1 tile
                pl.BlockSpec((th, d_out_pad),   lambda i, h: (h, 0)),  # W2 row tile
                pl.BlockSpec((1, d_out_pad),    lambda i, h: (0, 0)),  # b2
            ],
            out_specs=pl.BlockSpec((tm, d_out_pad), lambda i, h: (i, 0)),
            scratch_shapes=[pltpu.VMEM((tm, d_out_pad), jnp.float32)],
        ),
        compiler_params=pltpu.CompilerParams(
            dimension_semantics=("parallel", "arbitrary"),
        ),
    )(xm, w1, b1_2d, w2, b2_2d)

    out = out[:m, :d_out]
    return out.reshape(*lead_shape, d_out)


# --------------------------- pure-JAX reference ------------------------------

def mlp_reference(x, w1, b1, w2, b2):
    h = x @ w1 + b1
    h = jax.nn.gelu(h, approximate=False)
    # dropout(p=0.0) -> identity
    return h @ w2 + b2


# ---------------------------------- main -------------------------------------

if __name__ == "__main__":
    B, S = 2, 8
    D_IN, D_HID, D_OUT = 32, 256, 32      # (in_features, hidden_features, out_features)

    key = jax.random.PRNGKey(0)
    k_x, k_w1, k_b1, k_w2, k_b2 = jax.random.split(key, 5)

    # torch.nn.Linear-style uniform init, stored as (in, out)
    lim1 = 1.0 / math.sqrt(D_IN)
    lim2 = 1.0 / math.sqrt(D_HID)
    w1 = jax.random.uniform(k_w1, (D_IN, D_HID), jnp.float32, -lim1, lim1)
    b1 = jax.random.uniform(k_b1, (D_HID,), jnp.float32, -lim1, lim1)
    w2 = jax.random.uniform(k_w2, (D_HID, D_OUT), jnp.float32, -lim2, lim2)
    b2 = jax.random.uniform(k_b2, (D_OUT,), jnp.float32, -lim2, lim2)

    x = jax.random.normal(k_x, (B, S, D_IN), dtype=jnp.float32)

    ref = mlp_reference(x, w1, b1, w2, b2)

    # bf16 MXU operands (the fast path) -- loose tolerance vs. f32 reference.
    out_bf16 = mlp_forward(x, w1, b1, w2, b2,
                           block_rows=128, block_hidden=128,
                           compute_dtype=jnp.bfloat16)
    out_bf16 = jax.block_until_ready(out_bf16)
    assert out_bf16.shape == (B, S, D_OUT)
    assert jnp.allclose(out_bf16, ref, atol=2e-2, rtol=2e-2), (
        f"bf16 path max abs err {jnp.max(jnp.abs(out_bf16 - ref))}")

    # f32 operands -- exact-semantics check against the reference.
    out_f32 = mlp_forward(x, w1, b1, w2, b2,
                          block_rows=8, block_hidden=128,
                          compute_dtype=jnp.float32)
    out_f32 = jax.block_until_ready(out_f32)
    assert out_f32.shape == (B, S, D_OUT)
    assert jnp.allclose(out_f32, ref, atol=1e-5, rtol=1e-5), (
        f"f32 path max abs err {jnp.max(jnp.abs(out_f32 - ref))}")

    print("KERNEL_OK")
</pallas_src>

<mosaic_0001>
module attributes {stable_mosaic.version = 11 : i64} {
  func.func @mlp_kernel(%arg0: i32, %arg1: i32, %arg2: memref<16x32xf32, #tpu.memory_space<vmem>>, %arg3: memref<32x128xf32, #tpu.memory_space<vmem>>, %arg4: memref<1x128xf32, #tpu.memory_space<vmem>>, %arg5: memref<128x128xf32, #tpu.memory_space<vmem>>, %arg6: memref<1x128xf32, #tpu.memory_space<vmem>>, %arg7: memref<16x128xf32, #tpu.memory_space<vmem>>, %arg8: memref<16x128xf32, #tpu.memory_space<vmem>>) attributes {dimension_semantics = [#tpu.dimension_semantics<parallel>, #tpu.dimension_semantics<arbitrary>], iteration_bounds = array<i64: 1, 2>, scalar_prefetch = 0 : i64, scratch_operands = 1 : i64, tpu.core_type = #tpu.core_type<tc>, window_params = [{transform_indices = @transform_0, window_bounds = array<i64: 16, 32>}, {transform_indices = @transform_1, window_bounds = array<i64: 32, 128>}, {transform_indices = @transform_2, window_bounds = array<i64: 1, 128>}, {transform_indices = @transform_3, window_bounds = array<i64: 128, 128>}, {pipeline_mode = #tpu.pipeline_mode<synchronous>, transform_indices = @transform_4, window_bounds = array<i64: 1, 128>}, {transform_indices = @transform_5, window_bounds = array<i64: 16, 128>}]} {
    %c0_i32 = arith.constant 0 : i32
    %0 = arith.cmpi eq, %arg1, %c0_i32 : i32
    %1 = arith.extui %0 : i1 to i32
    %c0_i32_0 = arith.constant 0 : i32
    %2 = arith.cmpi ne, %1, %c0_i32_0 : i32
    scf.if %2 {
      %cst_17 = arith.constant 0.000000e+00 : f32
      %29 = vector.broadcast %cst_17 : f32 to vector<16x128xf32>
      %c0_18 = arith.constant 0 : index
      %c0_19 = arith.constant 0 : index
      %30 = vector.load %arg8[%c0_18, %c0_19] : memref<16x128xf32, #tpu.memory_space<vmem>>, vector<16x128xf32>
      tpu.vector_store %arg8[%c0_18, %c0_19], %29 {strides = array<i32>} : memref<16x128xf32, #tpu.memory_space<vmem>>, vector<16x128xf32>,
    } else {
    }
    %c0 = arith.constant 0 : index
    %c0_1 = arith.constant 0 : index
    %3 = vector.load %arg2[%c0, %c0_1] : memref<16x32xf32, #tpu.memory_space<vmem>>, vector<16x32xf32>
    %4 = arith.truncf %3 : vector<16x32xf32> to vector<16x32xbf16>
    %c0_2 = arith.constant 0 : index
    %c0_3 = arith.constant 0 : index
    %5 = vector.load %arg3[%c0_2, %c0_3] : memref<32x128xf32, #tpu.memory_space<vmem>>, vector<32x128xf32>
    %6 = arith.truncf %5 : vector<32x128xf32> to vector<32x128xbf16>
    %cst = arith.constant dense<0.000000e+00> : vector<16x128xf32>
    %7 = tpu.matmul %4, %6, %cst {dimension_numbers = #tpu.dot_dimension_numbers<[1], [0], [0], [1], [0, 0, 1, 1], [], []>} : vector<16x32xbf16>, vector<32x128xbf16>, vector<16x128xf32> -> vector<16x128xf32>
    %c0_4 = arith.constant 0 : index
    %c0_5 = arith.constant 0 : index
    %8 = vector.load %arg4[%c0_4, %c0_5] : memref<1x128xf32, #tpu.memory_space<vmem>>, vector<1x128xf32>
    %9 = vector.broadcast %8 : vector<1x128xf32> to vector<16x128xf32>
    %10 = arith.addf %7, %9 : vector<16x128xf32>
    %cst_6 = arith.constant 5.000000e-01 : f32
    %11 = vector.broadcast %cst_6 : f32 to vector<16x128xf32>
    %12 = arith.mulf %11, %10 : vector<16x128xf32>
    %cst_7 = arith.constant 0.707106769 : f32
    %13 = vector.broadcast %cst_7 : f32 to vector<16x128xf32>
    %14 = arith.mulf %10, %13 : vector<16x128xf32>
    %15 = math.erf %14 : vector<16x128xf32>
    %cst_8 = arith.constant 1.000000e+00 : f32
    %16 = vector.broadcast %cst_8 : f32 to vector<16x128xf32>
    %17 = arith.addf %16, %15 : vector<16x128xf32>
    %18 = arith.mulf %12, %17 : vector<16x128xf32>
    %c0_9 = arith.constant 0 : index
    %c0_10 = arith.constant 0 : index
    %19 = vector.load %arg8[%c0_9, %c0_10] : memref<16x128xf32, #tpu.memory_space<vmem>>, vector<16x128xf32>
    %20 = arith.truncf %18 : vector<16x128xf32> to vector<16x128xbf16>
    %c0_11 = arith.constant 0 : index
    %c0_12 = arith.constant 0 : index
    %21 = vector.load %arg5[%c0_11, %c0_12] : memref<128x128xf32, #tpu.memory_space<vmem>>, vector<128x128xf32>
    %22 = arith.truncf %21 : vector<128x128xf32> to vector<128x128xbf16>
    %cst_13 = arith.constant dense<0.000000e+00> : vector<16x128xf32>
    %23 = tpu.matmul %20, %22, %cst_13 {dimension_numbers = #tpu.dot_dimension_numbers<[1], [0], [0], [1], [0, 0, 1, 1], [], []>} : vector<16x128xbf16>, vector<128x128xbf16>, vector<16x128xf32> -> vector<16x128xf32>
    %24 = arith.addf %19, %23 : vector<16x128xf32>
    %c0_14 = arith.constant 0 : index
    %c0_15 = arith.constant 0 : index
    %25 = vector.load %arg8[%c0_14, %c0_15] : memref<16x128xf32, #tpu.memory_space<vmem>>, vector<16x128xf32>
    tpu.vector_store %arg8[%c0_14, %c0_15], %24 {strides = array<i32>} : memref<16x128xf32, #tpu.memory_space<vmem>>, vector<16x128xf32>,
    %c1_i32 = arith.constant 1 : i32
    %26 = arith.cmpi eq, %arg1, %c1_i32 : i32
    %27 = arith.extui %26 : i1 to i32
    %c0_i32_16 = arith.constant 0 : i32
    %28 = arith.cmpi ne, %27, %c0_i32_16 : i32
    scf.if %28 {
      %c0_17 = arith.constant 0 : index
      %c0_18 = arith.constant 0 : index
      %29 = vector.load %arg8[%c0_17, %c0_18] : memref<16x128xf32, #tpu.memory_space<vmem>>, vector<16x128xf32>
      %c0_19 = arith.constant 0 : index
      %c0_20 = arith.constant 0 : index
      %30 = vector.load %arg6[%c0_19, %c0_20] : memref<1x128xf32, #tpu.memory_space<vmem>>, vector<1x128xf32>
      %31 = vector.broadcast %30 : vector<1x128xf32> to vector<16x128xf32>
      %32 = arith.addf %29, %31 : vector<16x128xf32>
      %c0_21 = arith.constant 0 : index
      %c0_22 = arith.constant 0 : index
      %33 = vector.load %arg7[%c0_21, %c0_22] : memref<16x128xf32, #tpu.memory_space<vmem>>, vector<16x128xf32>
      tpu.vector_store %arg7[%c0_21, %c0_22], %32 {strides = array<i32>} : memref<16x128xf32, #tpu.memory_space<vmem>>, vector<16x128xf32>,
    } else {
    }
    return
  }
  func.func @transform_0(%arg0: i32, %arg1: i32) -> (i32, i32) {
    %c0_i32 = arith.constant 0 : i32
    %c0_i32_0 = arith.constant 0 : i32
    return %arg0, %c0_i32 : i32, i32
  }
  func.func @transform_1(%arg0: i32, %arg1: i32) -> (i32, i32) {
    %c0_i32 = arith.constant 0 : i32
    %c0_i32_0 = arith.constant 0 : i32
    return %c0_i32, %arg1 : i32, i32
  }
  func.func @transform_2(%arg0: i32, %arg1: i32) -> (i32, i32) {
    %c0_i32 = arith.constant 0 : i32
    %c0_i32_0 = arith.constant 0 : i32
    return %c0_i32, %arg1 : i32, i32
  }
  func.func @transform_3(%arg0: i32, %arg1: i32) -> (i32, i32) {
    %c0_i32 = arith.constant 0 : i32
    %c0_i32_0 = arith.constant 0 : i32
    return %arg1, %c0_i32 : i32, i32
  }
  func.func @transform_4(%arg0: i32, %arg1: i32) -> (i32, i32) {
    %c0_i32 = arith.constant 0 : i32
    %c0_i32_0 = arith.constant 0 : i32
    %c0_i32_1 = arith.constant 0 : i32
    return %c0_i32, %c0_i32_0 : i32, i32
  }
  func.func @transform_5(%arg0: i32, %arg1: i32) -> (i32, i32) {
    %c0_i32 = arith.constant 0 : i32
    %c0_i32_0 = arith.constant 0 : i32
    return %arg0, %c0_i32 : i32, i32
  }
}

</mosaic_0001>

<llo_original>
// kernel: tpu_custom_call.1
$region0: #{tpu_custom_call.1}
  #allocation0 [shape = 'u32[]', space=smem, size = 0x4, offset = 0x4, fixed_abs, tag = 'smem constant byte address 0x4 - core index']
  #allocation1 [shape = 'u32[144,128]{1,0:T(1,128)}', space=vmem, size = 0x12000, scoped, tag = 'internal scratch']
  #allocation2 [shape = 'f32[16,128]{1,0:T(8,128)}', space=vmem, size = 0x2000, scoped, tag = 'scratch operand']
  %s0 = inlined_call_operand.hbm [shape: f32[16,32], index: 0, kind: input, shape index: {}]
  %s1 = inlined_call_operand.hbm [shape: f32[32,256], index: 1, kind: input, shape index: {}]
  %s2 = inlined_call_operand.vmem [shape: f32[1,256], index: 2, kind: input, shape index: {}]
  %s3 = inlined_call_operand.hbm [shape: f32[256,128], index: 3, kind: input, shape index: {}]
  %s4 = inlined_call_operand.vmem [shape: f32[1,128], index: 4, kind: input, shape index: {}]
  %s5 = inlined_call_operand.hbm [shape: f32[16,128], index: 5, kind: output, shape index: {}]
  %s6 = sld [smem:[#allocation0]]
  $region73: #{tpu_custom_call.1} parent=0
    _
  %s8 = ssub.s32 1, %s6
  %s9 = scalar_select 0, %s8, %s6
  $region1: #{tpu_custom_call.1} parent=0
    #allocation3 [shape = 'u8[8192]{0}', space=vmem, size = 0x2000, scoped, tag = 'input window, operand 0, single buffered']
    #allocation4 [shape = 's32[2]{0}', space=sflag, size = 0x8, scoped, tag = 'scoped memory for tpu_custom_call.1']
    #allocation5 [shape = 's32[2]{0}', space=sflag, size = 0x8, scoped, tag = 'scoped memory for tpu_custom_call.1']
    #allocation6 [shape = 'u8[32768]{0}', space=vmem, size = 0x8000, scoped, tag = 'input window, operand 1']
    #allocation7 [shape = 's32[2]{0}', space=sflag, size = 0x8, scoped, tag = 'scoped memory for tpu_custom_call.1']
    #allocation8 [shape = 'u8[131072]{0}', space=vmem, size = 0x20000, scoped, tag = 'input window, operand 3']
    #allocation9 [shape = 'u8[8192]{0}', space=vmem, size = 0x2000, scoped, tag = 'output window, operand 0, single buffered']
    %10 = vsyncpa [#allocation4], 0
    %11 = vsyncpa [#allocation7], 0
    %s12 = scalar_lea.sflag [#allocation7], 1
    %13 = vsyncpa %s12, 0
    %14 = vsyncpa [#allocation5], 0
    loop: start=0, step=1, limit=4
    $region2: #{tpu_custom_call.1} parent=1 // loop_pre_header
      _
    $region3: #{tpu_custom_call.1} parent=1 // loop_header
      %s16 = sphi 0, %s20
      %p17 = scmp.ge.s32.totalorder %s16, 4
      %s23 = sphi 0, %s35
      %s24 = sphi 0, %s31
      %s25 = sphi 0, %s23
      %s26 = sphi 0, %s24
      %s27 = sphi 0, %s25
      %s28 = sphi 0, %s26
      %s38 = sphi 0, %s40
      %s41 = sphi 0, %s38
      %s42 = sphi 0, %s41
      %s58 = sphi 0, %s42
      %s64 = sphi 0, %s66
      %s67 = sphi 0, %s64
      %s68 = sphi 0, %s67
      %s84 = sphi 0, %s68
      %s90 = sphi 0, %s92
      %s93 = sphi 0, %s90
      %s94 = sphi 0, %s93
      %s110 = sphi 0, %s94
      %s116 = sphi 0, %s118
      %s119 = sphi 0, %s116
      %s120 = sphi 0, %s119
      %s136 = sphi 0, %s120
      %s140 = sphi 0, %s140
      %s142 = sphi 0, %s140
      %s143 = sphi 0, %s142
      %s157 = sphi 0, %s143
      %s163 = sphi 0, %s165
      %s166 = sphi 0, %s163
      %s167 = sphi 0, %s166
      %s183 = sphi 0, %s167
    $region4: #{tpu_custom_call.1} parent=1 // loop_header_branch
      %19 = sbr.rel (%p17) target = $region8
    $region5: #{tpu_custom_call.1} parent=1 // loop_body
      %s21 = ssub.s32 %s16, 1
      %s22 = ssub.s32 %s16, 2
      %s29 = sadd.s32 1, %s24
      %p30 = scmp.ge.s32.totalorder %s29, 2
      %s31 = scalar_select %p30, 0, %s29
      %s32 = sadd.s32 1, %s23
      %s33 = scalar_select %p30, %s32, %s23
      %p34 = scmp.ge.s32.totalorder %s33, 1
      %s35 = scalar_select %p34, 0, %s33
      %s36 = ssub.s32 %s23, %s35
      %p37 = scmp.eq.s32.totalorder %s36, 0
      %s39 = sadd.s32 %s38, 1
      %s40 = scalar_select %p37, %s38, %s39
      %p43 = pneg %p37
      %p44 = scmp.eq.s32.totalorder %s16, 1
      %p45 = por %p43, %p44
      %p46 = scmp.ne.s32.totalorder %s38, %s41
      %p47 = scmp.eq.s32.totalorder %s16, 0
      %p48 = por %p46, %p47
      %p49 = scmp.ne.s32.totalorder %s38, %s41
      %p50 = scmp.eq.s32.totalorder %s21, 1
      %p51 = por %p49, %p50
      %p52 = scmp.ne.s32.totalorder %s41, %s42
      %p53 = scmp.eq.s32.totalorder %s21, 0
      %p54 = por %p52, %p53
      %p55 = scmp.ne.s32.totalorder %s41, %s42
      %p56 = scmp.eq.s32.totalorder %s22, 1
      %p57 = por %p55, %p56
      %p59 = scmp.ne.s32.totalorder %s42, %s58
      %p60 = scmp.eq.s32.totalorder %s22, 0
      %p61 = por %p59, %p60
      %s62 = ssub.s32 %s24, %s31
      %p63 = scmp.eq.s32.totalorder %s62, 0
      %s65 = sadd.s32 %s64, 1
      %s66 = scalar_select %p63, %s64, %s65
      %p69 = pneg %p63
      %p70 = scmp.eq.s32.totalorder %s16, 1
      %p71 = por %p69, %p70
      %p72 = scmp.ne.s32.totalorder %s64, %s67
      %p73 = scmp.eq.s32.totalorder %s16, 0
      %p74 = por %p72, %p73
      %p75 = scmp.ne.s32.totalorder %s64, %s67
      %p76 = scmp.eq.s32.totalorder %s21, 1
      %p77 = por %p75, %p76
      %p78 = scmp.ne.s32.totalorder %s67, %s68
      %p79 = scmp.eq.s32.totalorder %s21, 0
      %p80 = por %p78, %p79
      %p81 = scmp.ne.s32.totalorder %s67, %s68
      %p82 = scmp.eq.s32.totalorder %s22, 1
      %p83 = por %p81, %p82
      %p85 = scmp.ne.s32.totalorder %s68, %s84
      %p86 = scmp.eq.s32.totalorder %s22, 0
      %p87 = por %p85, %p86
      %s88 = ssub.s32 %s24, %s31
      %p89 = scmp.eq.s32.totalorder %s88, 0
      %s91 = sadd.s32 %s90, 1
      %s92 = scalar_select %p89, %s90, %s91
      %p95 = pneg %p89
      %p96 = scmp.eq.s32.totalorder %s16, 1
      %p97 = por %p95, %p96
      %p98 = scmp.ne.s32.totalorder %s90, %s93
      %p99 = scmp.eq.s32.totalorder %s16, 0
      %p100 = por %p98, %p99
      %p101 = scmp.ne.s32.totalorder %s90, %s93
      %p102 = scmp.eq.s32.totalorder %s21, 1
      %p103 = por %p101, %p102
      %p104 = scmp.ne.s32.totalorder %s93, %s94
      %p105 = scmp.eq.s32.totalorder %s21, 0
      %p106 = por %p104, %p105
      %p107 = scmp.ne.s32.totalorder %s93, %s94
      %p108 = scmp.eq.s32.totalorder %s22, 1
      %p109 = por %p107, %p108
      %p111 = scmp.ne.s32.totalorder %s94, %s110
      %p112 = scmp.eq.s32.totalorder %s22, 0
      %p113 = por %p111, %p112
      %s114 = ssub.s32 %s24, %s31
      %p115 = scmp.eq.s32.totalorder %s114, 0
      %s117 = sadd.s32 %s116, 1
      %s118 = scalar_select %p115, %s116, %s117
      %p121 = pneg %p115
      %p122 = scmp.eq.s32.totalorder %s16, 1
      %p123 = por %p121, %p122
      %p124 = scmp.ne.s32.totalorder %s116, %s119
      %p125 = scmp.eq.s32.totalorder %s16, 0
      %p126 = por %p124, %p125
      %p127 = scmp.ne.s32.totalorder %s116, %s119
      %p128 = scmp.eq.s32.totalorder %s21, 1
      %p129 = por %p127, %p128
      %p130 = scmp.ne.s32.totalorder %s119, %s120
      %p131 = scmp.eq.s32.totalorder %s21, 0
      %p132 = por %p130, %p131
      %p133 = scmp.ne.s32.totalorder %s119, %s120
      %p134 = scmp.eq.s32.totalorder %s22, 1
      %p135 = por %p133, %p134
      %p137 = scmp.ne.s32.totalorder %s120, %s136
      %p138 = scmp.eq.s32.totalorder %s22, 0
      %p139 = por %p137, %p138
      %s141 = sadd.s32 %s140, 1
      %p144 = scmp.eq.s32.totalorder %s16, 1
      %p145 = scmp.ne.s32.totalorder %s140, %s142
      %p146 = scmp.eq.s32.totalorder %s16, 0
      %p147 = por %p145, %p146
      %p148 = scmp.ne.s32.totalorder %s140, %s142
      %p149 = scmp.eq.s32.totalorder %s21, 1
      %p150 = por %p148, %p149
      %p151 = scmp.ne.s32.totalorder %s142, %s143
      %p152 = scmp.eq.s32.totalorder %s21, 0
      %p153 = por %p151, %p152
      %p154 = scmp.ne.s32.totalorder %s142, %s143
      %p155 = scmp.eq.s32.totalorder %s22, 1
      %p156 = por %p154, %p155
      %p158 = scmp.ne.s32.totalorder %s143, %s157
      %p159 = scmp.eq.s32.totalorder %s22, 0
      %p160 = por %p158, %p159
      %s161 = ssub.s32 %s23, %s35
      %p162 = scmp.eq.s32.totalorder %s161, 0
      %s164 = sadd.s32 %s163, 1
      %s165 = scalar_select %p162, %s163, %s164
      %p168 = pneg %p162
      %p169 = scmp.eq.s32.totalorder %s16, 1
      %p170 = por %p168, %p169
      %p171 = scmp.ne.s32.totalorder %s163, %s166
      %p172 = scmp.eq.s32.totalorder %s16, 0
      %p173 = por %p171, %p172
      %p174 = scmp.ne.s32.totalorder %s163, %s166
      %p175 = scmp.eq.s32.totalorder %s21, 1
      %p176 = por %p174, %p175
      %p177 = scmp.ne.s32.totalorder %s166, %s167
      %p178 = scmp.eq.s32.totalorder %s21, 0
      %p179 = por %p177, %p178
      %p180 = scmp.ne.s32.totalorder %s166, %s167
      %p181 = scmp.eq.s32.totalorder %s22, 1
      %p182 = por %p180, %p181
      %p184 = scmp.ne.s32.totalorder %s167, %s183
      %p185 = scmp.eq.s32.totalorder %s22, 0
      %p186 = por %p184, %p185
      %p187 = scmp.le.s32.totalorder 1, %s16
      %p188 = scmp.lt.s32.totalorder %s16, 3
      %p189 = pnand %p187, %p188
      %p190 = pneg %p189
      // Predicated region
      $region9: #{tpu_custom_call.1} parent=5 // pred_check
        _
      $region10: #{tpu_custom_call.1} parent=5 // pred_check_branch
        %192 = sbr.rel (%p189) target = $region12
      $region11: #{tpu_custom_call.1} parent=5 // pred_region
        %s193 = ssub.s32 %s16, 1
        // Predicated region
        $region13: #{tpu_custom_call.1} parent=11 // pred_check
          %p194 = pneg %p54
        $region14: #{tpu_custom_call.1} parent=11 // pred_check_branch
          %196 = sbr.rel (%p194) target = $region16
        $region15: #{tpu_custom_call.1} parent=11 // pred_region
          %s197 = smul.u32 2, %s25
          %s199 = ssub.s32 256, 256
          %200 = vsyncadd [#allocation4], %s199
          %s201 = smul.addr %s197, 128
          %s202 = scalar_lea.hbm %s0, %s201
          %s203 = sshll.u32 [#allocation3], 4
          %s204 = int_to_ptr.vmem [resolvable:$true] %s203
          %209 = dma.hbm_to_vmem [thread:$0]  %s202, 256, %s204, [#allocation4], 128, 128, 8
        $region16: #{tpu_custom_call.1} parent=11 // pred_fallthru
          _
        // Predicated region
        $region17: #{tpu_custom_call.1} parent=11 // pred_check
          %p210 = pneg %p153
        $region18: #{tpu_custom_call.1} parent=11 // pred_check_branch
          %212 = sbr.rel (%p210) target = $region20
        $region19: #{tpu_custom_call.1} parent=11 // pred_region
          _
        $region20: #{tpu_custom_call.1} parent=11 // pred_fallthru
          _
      $region12: #{tpu_custom_call.1} parent=5 // pred_fallthru
        _
      %p213 = scmp.lt.s32.totalorder %s16, 2
      // Predicated region
      $region21: #{tpu_custom_call.1} parent=5 // pred_check
        %p214 = pneg %p213
      $region22: #{tpu_custom_call.1} parent=5 // pred_check_branch
        %216 = sbr.rel (%p214) target = $region24
      $region23: #{tpu_custom_call.1} parent=5 // pred_region
        // Predicated region
        $region25: #{tpu_custom_call.1} parent=23 // pred_check
          %p217 = pneg %p74
        $region26: #{tpu_custom_call.1} parent=23 // pred_check_branch
          %219 = sbr.rel (%p217) target = $region28
        $region27: #{tpu_custom_call.1} parent=23 // pred_region
          %s220 = sand.u32 %s16, 1
          %s221 = scalar_lea.sflag [#allocation7], %s220
          %s222 = sand.u32 %s64, 1
          %s223 = smul.addr %s222, 32
          %s224 = scalar_lea.vmem [#allocation6], %s223
          %s226 = ssub.s32 512, 512
          %227 = vsyncadd %s221, %s226
          %s228 = smul.addr %s24, 128
          %s229 = scalar_lea.hbm %s1, %s228
          %s230 = sshll.u32 %s224, 4
          %s231 = int_to_ptr.vmem [resolvable:$true] %s230
          %236 = dma.hbm_to_vmem [thread:$0]  %s229, 512, %s231, %s221, 256, 128, 8
        $region28: #{tpu_custom_call.1} parent=23 // pred_fallthru
          _
        // Predicated region
        $region29: #{tpu_custom_call.1} parent=23 // pred_check
          %p237 = pneg %p100
        $region30: #{tpu_custom_call.1} parent=23 // pred_check_branch
          %239 = sbr.rel (%p237) target = $region32
        $region31: #{tpu_custom_call.1} parent=23 // pred_region
          %p240 = scmp.lt.s32.totalorder %s24, 1
          %s241 = scalar_select %p240, %s24, 1
          %s242 = scalar_lea.vmem %s2, %s241
        $region32: #{tpu_custom_call.1} parent=23 // pred_fallthru
          _
        // Predicated region
        $region33: #{tpu_custom_call.1} parent=23 // pred_check
          %p243 = pneg %p126
        $region34: #{tpu_custom_call.1} parent=23 // pred_check_branch
          %245 = sbr.rel (%p243) target = $region36
        $region35: #{tpu_custom_call.1} parent=23 // pred_region
          %s246 = sand.u32 %s16, 1
          %s247 = scalar_lea.sflag [#allocation7], %s246
          %s248 = sand.u32 %s116, 1
          %s249 = smul.addr %s248, 128
          %s250 = scalar_lea.vmem [#allocation8], %s249
          %s251 = smul.u32 16, %s24
          %s253 = ssub.s32 2048, 2048
          %254 = vsyncadd %s247, %s253
          %s255 = smul.addr %s251, 128
          %s256 = scalar_lea.hbm %s3, %s255
          %s257 = sshll.u32 %s250, 4
          %s258 = int_to_ptr.vmem [resolvable:$true] %s257
          %263 = dma.hbm_to_vmem [thread:$0]  %s256, 2048, %s258, %s247, 128, 128, 8
        $region36: #{tpu_custom_call.1} parent=23 // pred_fallthru
          _
      $region24: #{tpu_custom_call.1} parent=5 // pred_fallthru
        _
      %p264 = scmp.le.s32.totalorder 1, %s16
      %p265 = scmp.lt.s32.totalorder %s16, 3
      %p266 = pnand %p264, %p265
      %p267 = pneg %p266
      // Predicated region
      $region37: #{tpu_custom_call.1} parent=5 // pred_check
        _
      $region38: #{tpu_custom_call.1} parent=5 // pred_check_branch
        %269 = sbr.rel (%p266) target = $region40
      $region39: #{tpu_custom_call.1} parent=5 // pred_region
        %s270 = ssub.s32 %s16, 1
        // Predicated region
        $region41: #{tpu_custom_call.1} parent=39 // pred_check
          %p271 = pneg %p54
        $region42: #{tpu_custom_call.1} parent=39 // pred_check_branch
          %273 = sbr.rel (%p271) target = $region44
        $region43: #{tpu_custom_call.1} parent=39 // pred_region
          %274 = dma.done [#allocation4], 256
        $region44: #{tpu_custom_call.1} parent=39 // pred_fallthru
          _
        %s275 = sand.u32 %s21, 1
        %s276 = scalar_lea.sflag [#allocation7], %s275
        %s277 = sand.u32 %s67, 1
        %s278 = smul.addr %s277, 32
        %s279 = scalar_lea.vmem [#allocation6], %s278
        // Predicated region
        $region45: #{tpu_custom_call.1} parent=39 // pred_check
          %p280 = pneg %p80
        $region46: #{tpu_custom_call.1} parent=39 // pred_check_branch
          %282 = sbr.rel (%p280) target = $region48
        $region47: #{tpu_custom_call.1} parent=39 // pred_region
          %283 = dma.done %s276, 512
        $region48: #{tpu_custom_call.1} parent=39 // pred_fallthru
          _
        %s284 = sand.u32 %s21, 1
        %s285 = scalar_lea.sflag [#allocation7], %s284
        %s286 = sand.u32 %s119, 1
        %s287 = smul.addr %s286, 128
        %s288 = scalar_lea.vmem [#allocation8], %s287
        // Predicated region
        $region49: #{tpu_custom_call.1} parent=39 // pred_check
          %p289 = pneg %p132
        $region50: #{tpu_custom_call.1} parent=39 // pred_check_branch
          %291 = sbr.rel (%p289) target = $region52
        $region51: #{tpu_custom_call.1} parent=39 // pred_region
          %292 = dma.done %s285, 2048
        $region52: #{tpu_custom_call.1} parent=39 // pred_fallthru
          _
        %p293 = pneg %p54
        %p294 = pneg %p51
        %s295 = sand.u32 %s21, 1
        %s296 = scalar_lea.sflag [#allocation7], %s295
        %s297 = sand.u32 %s67, 1
        %s298 = smul.addr %s297, 32
        %s299 = scalar_lea.vmem [#allocation6], %s298
        %p300 = pneg %p80
        %p301 = pneg %p77
        %p302 = scmp.lt.s32.totalorder %s26, 1
        %s303 = scalar_select %p302, %s26, 1
        %s304 = scalar_lea.vmem %s2, %s303
        %p305 = pneg %p106
        %p306 = pneg %p103
        %s307 = sand.u32 %s21, 1
        %s308 = scalar_lea.sflag [#allocation7], %s307
        %s309 = sand.u32 %s119, 1
        %s310 = smul.addr %s309, 128
        %s311 = scalar_lea.vmem [#allocation8], %s310
        %p312 = pneg %p132
        %p313 = pneg %p129
        %p314 = pneg %p153
        %p315 = pneg %p150
        %p316 = pneg %p179
        %p317 = pneg %p176
        %s318 = smul.u32 2, %s25
        %p319 = scmp.lt.s32.totalorder %s26, 1
        %s320 = scalar_select %p319, %s26, 1
        %s321 = scalar_lea.vmem %s2, %s320
        %s322 = smul.u32 16, %s26
        %s323 = smul.u32 2, %s25
        %p325 = scmp.eq.s32.totalorder %s26, 0
        // Predicated region
        $region53: #{tpu_custom_call.1} parent=39 // pred_check
          %p326 = pneg %p325
        $region54: #{tpu_custom_call.1} parent=39 // pred_check_branch
          %328 = sbr.rel (%p326) target = $region56
        $region55: #{tpu_custom_call.1} parent=39 // pred_region
          %329 = vst [vmem:[#allocation2] sm:$0xff] 0.0
          %330 = vst [vmem:[#allocation2 + $0x8] sm:$0xff] 0.0
        $region56: #{tpu_custom_call.1} parent=39 // pred_fallthru
          _
        %v331 = vld [vmem:[#allocation3] sm:$0xff]
        %v332 = vld [vmem:[#allocation3 + $0x8] sm:$0xff]
        %v333 = vpack.c.bf16 %v332, %v331
        %v334 = vld [vmem:[%s279] sm:$0xff]
        %v335 = vld [vmem:[%s279 + $0x8] sm:$0xff]
        %v336 = vld [vmem:[%s279 + $0x10] sm:$0xff]
        %v337 = vld [vmem:[%s279 + $0x18] sm:$0xff]
        %v338 = vpack.c.bf16 %v335, %v334
        %v339 = vpack.c.bf16 %v337, %v336
        %v340 = vld [vmem:[%s321] sm:$0x1]
        %v342 = vlaneseq
        %v343 = vshrl.u32 %v342, 7
        %v344 = vsub.s32 0, %v343
        %v345 = vrot.slane %v340, %v344
        %vm347 = vcmask 261120
        %v349 = vsel %vm347, %v333, 0
        %351 = vmatprep.subr.bf16.mxu0 0
        %352 = vmatpush1.bf16.msra.mxu0 0
        %353 = vmatprep.subr.bf16.mxu0 0
        %354 = vmatpush1.bf16.msra.mxu0 0
        %355 = vmatprep.subr.bf16.mxu0 0
        %356 = vmatpush1.bf16.msra.mxu0 0
        %357 = vmatprep.subr.bf16.mxu0 0
        %358 = vmatpush1.bf16.msra.mxu0 0
        %359 = vmatprep.subr.bf16.mxu0 0
        %360 = vmatpush1.bf16.msra.mxu0 0
        %361 = vmatprep.subr.bf16.mxu0 0
        %362 = vmatpush1.bf16.msra.mxu0 0
        %363 = vmatprep.subr.bf16.mxu0 0
        %364 = vmatpush1.bf16.msra.mxu0 %v339
        %365 = vmatprep.subr.bf16.mxu0 0
        %366 = vmatpush1.bf16.msra.mxu0 %v338
        %367 = vmatprep.subr.bf16.mxu0 0
        %368 = vmatpush2.bf16.msra.mxu0 0
        %369 = vmatprep.subr.bf16.mxu0 0
        %370 = vmatpush2.bf16.msra.mxu0 0
        %371 = vmatprep.subr.bf16.mxu0 0
        %372 = vmatpush2.bf16.msra.mxu0 0
        %373 = vmatprep.subr.bf16.mxu0 0
        %374 = vmatpush2.bf16.msra.mxu0 0
        %375 = vmatprep.subr.bf16.mxu0 0
        %376 = vmatpush2.bf16.msra.mxu0 0
        %377 = vmatprep.subr.bf16.mxu0 0
        %378 = vmatpush2.bf16.msra.mxu0 0
        %379 = vmatprep.subr.bf16.mxu0 0
        %380 = vmatpush2.bf16.msra.mxu0 0
        %381 = vmatprep.subr.bf16.mxu0 0
        %382 = vmatpush2.bf16.msra.mxu0 0
        %383 = vmatprep.mubr.bf16.mxu0 0
        %384 = vmatmul.mubr.bf16.gmra.mxu0 %v349
        %v385 = vpop.f32.mrf.mxu0
        %v386 = vadd.f32 %v345, %v385
        %v387 = vpop.f32.mrf.mxu0
        %v388 = vpop.f32.mrf.mxu0
        %v389 = vadd.f32 %v345, %v388
        %v390 = vpop.f32.mrf.mxu0
        %391 = vdwg.mxu0
        %v392 = vmul.f32 %v386, 0.5
        %v393 = vmul.f32 %v389, 0.5
        %v394 = vmul.f32 %v386, 0.70710677
        %v395 = vmul.f32 %v389, 0.70710677
        %v396 = verf.f32.pop %v394
        %v397 = verf.f32.pop %v395
        %v398 = vadd.f32 %v396, 1.0
        %v399 = vadd.f32 %v397, 1.0
        %v400 = vmul.f32 %v392, %v398
        %v401 = vmul.f32 %v393, %v399
        %v402 = vld [vmem:[#allocation2] sm:$0xff]
        %v403 = vld [vmem:[#allocation2 + $0x8] sm:$0xff]
        %v404 = vpack.c.bf16 %v401, %v400
        %v405 = vld [vmem:[%s288] sm:$0xff]
        %v406 = vld [vmem:[%s288 + $0x8] sm:$0xff]
        %v407 = vld [vmem:[%s288 + $0x10] sm:$0xff]
        %v408 = vld [vmem:[%s288 + $0x18] sm:$0xff]
        %v409 = vld [vmem:[%s288 + $0x20] sm:$0xff]
        %v410 = vld [vmem:[%s288 + $0x28] sm:$0xff]
        %v411 = vld [vmem:[%s288 + $0x30] sm:$0xff]
        %v412 = vld [vmem:[%s288 + $0x38] sm:$0xff]
        %v413 = vld [vmem:[%s288 + $0x40] sm:$0xff]
        %v414 = vld [vmem:[%s288 + $0x48] sm:$0xff]
        %v415 = vld [vmem:[%s288 + $0x50] sm:$0xff]
        %v416 = vld [vmem:[%s288 + $0x58] sm:$0xff]
        %v417 = vld [vmem:[%s288 + $0x60] sm:$0xff]
        %v418 = vld [vmem:[%s288 + $0x68] sm:$0xff]
        %v419 = vld [vmem:[%s288 + $0x70] sm:$0xff]
        %v420 = vld [vmem:[%s288 + $0x78] sm:$0xff]
        %v421 = vpack.c.bf16 %v406, %v405
        %v422 = vpack.c.bf16 %v408, %v407
        %v423 = vpack.c.bf16 %v410, %v409
        %v424 = vpack.c.bf16 %v412, %v411
        %v425 = vpack.c.bf16 %v414, %v413
        %v426 = vpack.c.bf16 %v416, %v415
        %v427 = vpack.c.bf16 %v418, %v417
        %v428 = vpack.c.bf16 %v420, %v419
        %429 = vmatprep.subr.bf16.mxu0 0
        %430 = vmatpush1.bf16.msra.mxu0 %v428
        %431 = vmatprep.subr.bf16.mxu0 0
        %432 = vmatpush1.bf16.msra.mxu0 %v427
        %433 = vmatprep.subr.bf16.mxu0 0
        %434 = vmatpush1.bf16.msra.mxu0 %v426
        %435 = vmatprep.subr.bf16.mxu0 0
        %436 = vmatpush1.bf16.msra.mxu0 %v425
        %437 = vmatprep.subr.bf16.mxu0 0
        %438 = vmatpush1.bf16.msra.mxu0 %v424
        %439 = vmatprep.subr.bf16.mxu0 0
        %440 = vmatpush1.bf16.msra.mxu0 %v423
        %441 = vmatprep.subr.bf16.mxu0 0
        %442 = vmatpush1.bf16.msra.mxu0 %v422
        %443 = vmatprep.subr.bf16.mxu0 0
        %444 = vmatpush1.bf16.msra.mxu0 %v421
        %445 = vmatprep.subr.bf16.mxu0 0
        %446 = vmatpush2.bf16.msra.mxu0 0
        %447 = vmatprep.subr.bf16.mxu0 0
        %448 = vmatpush2.bf16.msra.mxu0 0
        %449 = vmatprep.subr.bf16.mxu0 0
        %450 = vmatpush2.bf16.msra.mxu0 0
        %451 = vmatprep.subr.bf16.mxu0 0
        %452 = vmatpush2.bf16.msra.mxu0 0
        %453 = vmatprep.subr.bf16.mxu0 0
        %454 = vmatpush2.bf16.msra.mxu0 0
        %455 = vmatprep.subr.bf16.mxu0 0
        %456 = vmatpush2.bf16.msra.mxu0 0
        %457 = vmatprep.subr.bf16.mxu0 0
        %458 = vmatpush2.bf16.msra.mxu0 0
        %459 = vmatprep.subr.bf16.mxu0 0
        %460 = vmatpush2.bf16.msra.mxu0 0
        %461 = vmatprep.mubr.bf16.mxu0 0
        %462 = vmatmul.mubr.bf16.gmra.mxu0 %v404
        %v463 = vpop.f32.mrf.mxu0
        %v464 = vadd.f32 0.0, %v463
        %v465 = vpop.f32.mrf.mxu0
        %v466 = vpop.f32.mrf.mxu0
        %v467 = vadd.f32 0.0, %v466
        %v468 = vpop.f32.mrf.mxu0
        %469 = vdwg.mxu0
        %v470 = vadd.f32 %v402, %v464
        %v471 = vadd.f32 %v403, %v467
        %472 = vst [vmem:[#allocation2] sm:$0xff] %v470
        %473 = vst [vmem:[#allocation2 + $0x8] sm:$0xff] %v471
        %p474 = scmp.eq.s32.totalorder %s26, 1
        // Predicated region
        $region57: #{tpu_custom_call.1} parent=39 // pred_check
          %p475 = pneg %p474
        $region58: #{tpu_custom_call.1} parent=39 // pred_check_branch
          %477 = sbr.rel (%p475) target = $region60
        $region59: #{tpu_custom_call.1} parent=39 // pred_region
          %v478 = vld [vmem:[#allocation2] sm:$0xff]
          %v479 = vld [vmem:[#allocation2 + $0x8] sm:$0xff]
          %v480 = vld [vmem:[%s4] sm:$0x1]
          %v482 = vlaneseq
          %v483 = vshrl.u32 %v482, 7
          %v484 = vsub.s32 0, %v483
          %v485 = vrot.slane %v480, %v484
          %v487 = vadd.f32 %v478, %v485
          %v488 = vadd.f32 %v479, %v485
          %489 = vst [vmem:[#allocation9] sm:$0xff] %v487
          %490 = vst [vmem:[#allocation9 + $0x8] sm:$0xff] %v488
        $region60: #{tpu_custom_call.1} parent=39 // pred_fallthru
          _
        // Predicated region
        $region61: #{tpu_custom_call.1} parent=39 // pred_check
          %p491 = pneg %p176
        $region62: #{tpu_custom_call.1} parent=39 // pred_check_branch
          %493 = sbr.rel (%p491) target = $region64
        $region63: #{tpu_custom_call.1} parent=39 // pred_region
          %s494 = smul.u32 2, %s25
          %s496 = ssub.s32 256, 256
          %497 = vsyncadd [#allocation5], %s496
          %s498 = smul.addr %s494, 128
          %s499 = scalar_lea.hbm %s5, %s498
          %s500 = sshll.u32 [#allocation9], 4
          %s501 = int_to_ptr.vmem [resolvable:$true] %s500
          %506 = dma.vmem_to_hbm [thread:$0]  %s501, 256, %s499, [#allocation5], 128, 128, 8
        $region64: #{tpu_custom_call.1} parent=39 // pred_fallthru
          _
        // Predicated region
        $region65: #{tpu_custom_call.1} parent=39 // pred_check
          %p507 = pneg %p176
        $region66: #{tpu_custom_call.1} parent=39 // pred_check_branch
          %509 = sbr.rel (%p507) target = $region68
        $region67: #{tpu_custom_call.1} parent=39 // pred_region
          %510 = dma.done [#allocation5], 256
        $region68: #{tpu_custom_call.1} parent=39 // pred_fallthru
          _
      $region40: #{tpu_custom_call.1} parent=5 // pred_fallthru
        _
      %p511 = scmp.le.s32.totalorder 2, %s16
      // Predicated region
      $region69: #{tpu_custom_call.1} parent=5 // pred_check
        %p512 = pneg %p511
      $region70: #{tpu_custom_call.1} parent=5 // pred_check_branch
        %514 = sbr.rel (%p512) target = $region72
      $region71: #{tpu_custom_call.1} parent=5 // pred_region
        %s515 = ssub.s32 %s16, 2
      $region72: #{tpu_custom_call.1} parent=5 // pred_fallthru
        _
    $region6: #{tpu_custom_call.1} parent=1 // loop_footer
      %s20 = sadd.s32 1, %s16
    $region7: #{tpu_custom_call.1} parent=1 // loop_footer_branch
      %15 = sbr.rel target = $region3
    $region8: #{tpu_custom_call.1} parent=1 // loop_exit
      _
    %516 = vsyncpa [#allocation4], 1
    %s517 = scalar_lea.sflag [#allocation4], 1
    %518 = vsyncpa %s517, 1
    %519 = vsyncpa [#allocation7], 1
    %s520 = scalar_lea.sflag [#allocation7], 1
    %521 = vsyncpa %s520, 1
    %522 = vsyncpa [#allocation5], 1
    %s523 = scalar_lea.sflag [#allocation5], 1
    %524 = vsyncpa %s523, 1

</llo_original>
